<compile_context>
chip_gen: v7x
topology: tpu7x:2x2x1
jax: 0.10.0
libtpu: 0.0.40
codegen_flags: <defaults>
</compile_context>

<pallas_src>
import jax
import jax.numpy as jnp
from jax.experimental import pallas as pl
from jax.experimental.pallas import tpu as pltpu


def _copy_kernel(x_ref, o_ref):
    # Pure VMEM tile copy (lane-dense tile -> unmasked vst on the store path).
    o_ref[...] = x_ref[...]


_LANES = 1024      # large multiple of 128 -> full-lane, unmasked stores
_TILE_ROWS = 512   # 512 x 1024 x 4B ~= 2 MiB per block; 2x(in+out) buffers ~= 8 MiB VMEM


def _materialized_identity(x):
    """Physical copy of `x` via a lane-dense tiled Pallas kernel."""
    n = x.size
    lanes = _LANES if n >= _LANES else 128
    rows = pl.cdiv(n, lanes)
    tile_rows = _TILE_ROWS if rows >= _TILE_ROWS else rows  # full-dim block if small
    grid_rows = pl.cdiv(rows, tile_rows)
    padded_rows = grid_rows * tile_rows
    padded_n = padded_rows * lanes

    flat = jnp.ravel(x)
    if padded_n != n:
        flat = jnp.pad(flat, (0, padded_n - n))
    flat2d = flat.reshape(padded_rows, lanes)

    out2d = pl.pallas_call(
        _copy_kernel,
        out_shape=jax.ShapeDtypeStruct((padded_rows, lanes), x.dtype),
        grid=(grid_rows,),
        in_specs=[pl.BlockSpec((tile_rows, lanes), lambda r: (r, 0))],
        out_specs=pl.BlockSpec((tile_rows, lanes), lambda r: (r, 0)),
        input_output_aliases={0: 0},  # let XLA elide the round trip when it can
        compiler_params=pltpu.CompilerParams(
            dimension_semantics=("parallel",),       # megacore-shardable tiles
            vmem_limit_bytes=32 * 1024 * 1024,       # safe under v7x 64 MiB VMEM
        ),
    )(flat2d)

    return out2d.reshape(padded_n)[:n].reshape(x.shape)


_materialized_identity_jit = jax.jit(_materialized_identity)


def encoder_oracle_forward(x, rl=True, materialize=False):
    """Pallas/JAX implementation of EncoderOracle.forward.

    Default (recommended) path: return x unchanged — zero bytes of HBM traffic,
    matching the module's identity semantics exactly.  `materialize=True`
    forces a physical copy through the lane-dense Pallas kernel when a real op
    boundary / fresh output buffer is needed.
    `rl` is accepted for signature parity and ignored (as in the PyTorch code).
    """
    del rl
    if not materialize:
        return x
    return _materialized_identity_jit(x)


if __name__ == "__main__":
    key = jax.random.PRNGKey(0)
    # Small NCHW input consistent with the module's forward (any tensor works).
    x = jax.random.normal(key, (2, 4, 16, 16), dtype=jnp.float32)

    # Zero-cost identity path (the primary optimization: no kernel launched).
    fast = encoder_oracle_forward(x)
    assert fast is x

    # Materialized Pallas copy path — run the kernel once and verify.
    out = encoder_oracle_forward(x, materialize=True)
    out = jax.block_until_ready(out)

    assert out.shape == x.shape and out.dtype == x.dtype
    assert bool(jnp.all(out == x))
    print("KERNEL_OK")
</pallas_src>

<mosaic_0001>
module attributes {stable_mosaic.version = 11 : i64} {
  func.func @_copy_kernel(%arg0: i32, %arg1: memref<2x1024xf32, #tpu.memory_space<vmem>>, %arg2: memref<2x1024xf32, #tpu.memory_space<vmem>>) attributes {dimension_semantics = [#tpu.dimension_semantics<parallel>], iteration_bounds = array<i64: 1>, scalar_prefetch = 0 : i64, scratch_operands = 0 : i64, tpu.core_type = #tpu.core_type<tc>, window_params = [{transform_indices = @transform_0, window_bounds = array<i64: 2, 1024>}, {transform_indices = @transform_1, window_bounds = array<i64: 2, 1024>}]} {
    %c0 = arith.constant 0 : index
    %c0_0 = arith.constant 0 : index
    %0 = vector.load %arg1[%c0, %c0_0] : memref<2x1024xf32, #tpu.memory_space<vmem>>, vector<2x1024xf32>
    %c0_1 = arith.constant 0 : index
    %c0_2 = arith.constant 0 : index
    %1 = vector.load %arg2[%c0_1, %c0_2] : memref<2x1024xf32, #tpu.memory_space<vmem>>, vector<2x1024xf32>
    tpu.vector_store %arg2[%c0_1, %c0_2], %0 {strides = array<i32>} : memref<2x1024xf32, #tpu.memory_space<vmem>>, vector<2x1024xf32>,
    return
  }
  func.func @transform_0(%arg0: i32) -> (i32, i32) {
    %c0_i32 = arith.constant 0 : i32
    %c0_i32_0 = arith.constant 0 : i32
    return %arg0, %c0_i32 : i32, i32
  }
  func.func @transform_1(%arg0: i32) -> (i32, i32) {
    %c0_i32 = arith.constant 0 : i32
    %c0_i32_0 = arith.constant 0 : i32
    return %arg0, %c0_i32 : i32, i32
  }
}

</mosaic_0001>

<llo_original>
// kernel: _materialized_identity.1
$region0: #{_materialized_identity.1}
  #allocation0 [shape = 'u32[]', space=smem, size = 0x4, offset = 0x4, fixed_abs, tag = 'smem constant byte address 0x4 - core index']
  #allocation1 [shape = 'u32[144,128]{1,0:T(1,128)}', space=vmem, size = 0x12000, scoped, tag = 'internal scratch']
  %s0 = inlined_call_operand.vmem [shape: f32[2,1024], index: 0, kind: input, shape index: {}, may-alias: {0,1}]
  %s1 = inlined_call_operand.vmem [shape: f32[2,1024], index: 1, kind: output, shape index: {}, may-alias: {0,1}]
  %s2 = sld [smem:[#allocation0]]
  $region14: #{_materialized_identity.1} parent=0
    _
  %s4 = ssub.s32 1, %s2
  %s5 = scalar_select 0, %s4, %s2
  // Predicated region
  $region2: #{_materialized_identity.1} parent=0 // pred_check
    _
  $region3: #{_materialized_identity.1} parent=0 // pred_check_branch
    %7 = sbr.rel (0) target = $region5
  $region4: #{_materialized_identity.1} parent=0 // pred_region
    _
  $region5: #{_materialized_identity.1} parent=0 // pred_fallthru
    _
  %v8 = vld [vmem:[%s0] sm:$0xff]
  %v9 = vld [vmem:[%s0 + $0x8] sm:$0xff]
  %10 = vst [vmem:[%s1] sm:$0xff] %v8
  %11 = vst [vmem:[%s1 + $0x8] sm:$0xff] %v9
  // Predicated region
  $region6: #{_materialized_identity.1} parent=0 // pred_check
    _
  $region7: #{_materialized_identity.1} parent=0 // pred_check_branch
    %13 = sbr.rel (0) target = $region9
  $region8: #{_materialized_identity.1} parent=0 // pred_region
    _
  $region9: #{_materialized_identity.1} parent=0 // pred_fallthru
    _
  // Predicated region
  $region10: #{_materialized_identity.1} parent=0 // pred_check
    _
  $region11: #{_materialized_identity.1} parent=0 // pred_check_branch
    %15 = sbr.rel (0) target = $region13
  $region12: #{_materialized_identity.1} parent=0 // pred_region
    _
  $region13: #{_materialized_identity.1} parent=0 // pred_fallthru
    _

</llo_original>
